<compile_context>
chip_gen: v7x
topology: tpu7x:2x2x1
jax: 0.10.0
libtpu: 0.0.40
codegen_flags: <defaults>
</compile_context>

<pallas_src>
import functools

import jax
import jax.numpy as jnp
from jax.experimental import pallas as pl
from jax.experimental.pallas import tpu as pltpu


def _round_up(x, m):
    return ((x + m - 1) // m) * m


def _mac_kernel(feat_ref, idx_ref, out_ref, acc_ref, *,
                num_batches, n_rows, chunks_per_core):
    """Per-batch global max pooling over one tile of points.

    feat_ref : (TN, C)    point-feature tile (kept in the input dtype)
    idx_ref  : (TN, 1)    int32 batch index per point (tail rows are garbage,
                          masked via absolute row ids)
    out_ref  : (1, B, C)  per-core output slab, written only on the last step
    acc_ref  : (B_pad, C) f32 VMEM accumulator, sublane-aligned, persistent
    """
    c = pl.program_id(0)          # core / row-shard axis ("parallel")
    i = pl.program_id(1)          # chunk axis ("arbitrary", reduction)
    tile_n, chans = feat_ref.shape

    @pl.when(i == 0)
    def _init():
        acc_ref[...] = jnp.full_like(acc_ref, -jnp.inf)

    feat = feat_ref[...]                              # (TN, C), input dtype
    neg = jnp.array(-jnp.inf, feat.dtype)

    # Absolute row ids of this tile; rows >= n_rows are padding / clamped
    # reads.  Fold the validity mask into the index once (invalid -> -1) so
    # the sublane-sparse (TN, 1) vregs are only processed a single time.
    chunk = c * chunks_per_core + i
    row = chunk * tile_n + jax.lax.broadcasted_iota(jnp.int32, (tile_n, 1), 0)
    idx = jnp.where(row < n_rows, idx_ref[...], -1)   # (TN, 1) int32

    # Per-batch masked max in the input dtype.  num_batches is small; the
    # Python loop is unrolled at trace time.
    # TODO(synk): for large num_batches, switch to batch-sorted grouped tiling
    # via PrefetchScalarGridSpec so compute stays O(N*C) instead of O(B*N*C).
    updates = []
    for b in range(num_batches):
        masked = jnp.where(idx == b, feat, neg)       # (TN, C)
        updates.append(jnp.max(masked, axis=0, keepdims=True))   # (1, C)
    b_pad = acc_ref.shape[0]
    upd = jnp.concatenate(updates, axis=0).astype(jnp.float32)   # (B, C)
    if b_pad > num_batches:
        upd = jnp.concatenate(
            [upd, jnp.full((b_pad - num_batches, chans), -jnp.inf, jnp.float32)],
            axis=0)                                   # (B_pad, C) unmasked store
    acc_ref[...] = jnp.maximum(acc_ref[...], upd)

    @pl.when(i == pl.num_programs(1) - 1)
    def _finalize():
        out_ref[0, :, :] = acc_ref[0:num_batches, :].astype(out_ref.dtype)


def mac_global_max_pool(features, batch_idx, num_batches, *,
                        tile_n=None, num_cores=2):
    """features: (N, C) float, batch_idx: (N,) int in [0, num_batches).

    Returns (num_batches, C) per-batch max of features (dtype of `features`).
    Batches with no points produce -inf rows (matches the masked-max reference).
    """
    N, C = features.shape
    itemsize = jnp.dtype(features.dtype).itemsize

    if tile_n is None:
        # ~4 MiB feature blocks; double-buffered inputs (2 x 4 MiB + idx) stay
        # comfortably under the scoped-VMEM defaults on v5e/v6e/v7x.
        tile_n = (4 << 20) // (itemsize * max(C, 1))
        tile_n = max(512, min(tile_n, 8192))
    if tile_n >= N:
        tile_n = N                          # full-array block: always layout-legal
    else:
        tile_n = max(8, (tile_n // 8) * 8)  # keep sublane-aligned blocks

    chunks_total = pl.cdiv(N, tile_n)
    num_cores = max(1, min(num_cores, chunks_total))
    chunks_per_core = pl.cdiv(chunks_total, num_cores)

    b_pad = _round_up(num_batches, 8)
    idx2d = batch_idx.astype(jnp.int32).reshape(N, 1)

    kernel = functools.partial(
        _mac_kernel, num_batches=num_batches, n_rows=N,
        chunks_per_core=chunks_per_core)

    # Row-chunk block index; clamped so trailing (empty) chunks on the last
    # core read an in-bounds block (their rows are masked out in-kernel).
    def row_map(c, i):
        return (jnp.minimum(c * chunks_per_core + i, chunks_total - 1), 0)

    out = pl.pallas_call(
        kernel,
        out_shape=jax.ShapeDtypeStruct((num_cores, num_batches, C),
                                       features.dtype),
        grid=(num_cores, chunks_per_core),
        in_specs=[
            pl.BlockSpec((tile_n, C), row_map),
            pl.BlockSpec((tile_n, 1), row_map),
        ],
        out_specs=pl.BlockSpec((1, num_batches, C), lambda c, i: (c, 0, 0)),
        scratch_shapes=[pltpu.VMEM((b_pad, C), jnp.float32)],
        compiler_params=pltpu.CompilerParams(
            dimension_semantics=("parallel", "arbitrary")),
    )(features, idx2d)

    # Combine the per-core partial maxima (no-op when num_cores == 1).
    return jnp.max(out, axis=0)


def _reference(features, batch_idx, num_batches):
    feats = features.astype(jnp.float32)
    outs = []
    for b in range(num_batches):
        mask = (batch_idx == b)[:, None]
        outs.append(jnp.max(jnp.where(mask, feats, -jnp.inf), axis=0))
    return jnp.stack(outs, axis=0).astype(features.dtype)


if __name__ == "__main__":
    key = jax.random.PRNGKey(0)
    k1, k2, k3 = jax.random.split(key, 3)

    # Case 1: tiny sparse tensor, single tile. 2 batches, 48 points, 32 channels.
    nb1 = 2
    sizes1 = (20, 28)
    feats1 = jax.random.normal(k1, (sum(sizes1), 32), dtype=jnp.float32)
    idx1 = jnp.concatenate(
        [jnp.full((s,), b, jnp.int32) for b, s in enumerate(sizes1)])
    out1 = jax.block_until_ready(mac_global_max_pool(feats1, idx1, nb1))
    ref1 = _reference(feats1, idx1, nb1)
    assert out1.shape == (nb1, 32), out1.shape
    assert jnp.allclose(out1, ref1, atol=1e-6, rtol=1e-6), "case1 mismatch"

    # Case 2: multi-tile + 2-way core split + partial tail tile + clamped chunk.
    nb2 = 3
    sizes2 = (100, 80, 120)   # N = 300, not a multiple of tile_n
    feats2 = jax.random.normal(k2, (sum(sizes2), 32), dtype=jnp.float32)
    idx2 = jnp.concatenate(
        [jnp.full((s,), b, jnp.int32) for b, s in enumerate(sizes2)])
    out2 = jax.block_until_ready(
        mac_global_max_pool(feats2, idx2, nb2, tile_n=64))
    ref2 = _reference(feats2, idx2, nb2)
    assert out2.shape == (nb2, 32), out2.shape
    assert jnp.allclose(out2, ref2, atol=1e-6, rtol=1e-6), "case2 mismatch"

    # Case 3: bf16 features exercise the in-kernel native-dtype max path
    # (max is a selection op, so results match the f32 reference exactly).
    nb3 = 2
    sizes3 = (150, 106)       # N = 256
    feats3 = jax.random.normal(k3, (sum(sizes3), 64), dtype=jnp.float32)
    feats3 = feats3.astype(jnp.bfloat16)
    idx3 = jnp.concatenate(
        [jnp.full((s,), b, jnp.int32) for b, s in enumerate(sizes3)])
    out3 = jax.block_until_ready(
        mac_global_max_pool(feats3, idx3, nb3, tile_n=96))
    ref3 = _reference(feats3, idx3, nb3)
    assert out3.shape == (nb3, 64), out3.shape
    assert jnp.allclose(out3.astype(jnp.float32), ref3.astype(jnp.float32),
                        atol=1e-2, rtol=1e-2), "case3 mismatch"

    print("KERNEL_OK")
</pallas_src>

<mosaic_0001>
module attributes {stable_mosaic.version = 11 : i64} {
  func.func @_mac_kernel(%arg0: i32, %arg1: i32, %arg2: memref<48x32xf32, #tpu.memory_space<vmem>>, %arg3: memref<48x1xi32, #tpu.memory_space<vmem>>, %arg4: memref<1x2x32xf32, #tpu.memory_space<vmem>>, %arg5: memref<8x32xf32, #tpu.memory_space<vmem>>) attributes {dimension_semantics = [#tpu.dimension_semantics<parallel>, #tpu.dimension_semantics<arbitrary>], iteration_bounds = array<i64: 1, 1>, scalar_prefetch = 0 : i64, scratch_operands = 1 : i64, tpu.core_type = #tpu.core_type<tc>, window_params = [{transform_indices = @transform_0, window_bounds = array<i64: 48, 32>}, {transform_indices = @transform_1, window_bounds = array<i64: 48, 1>}, {transform_indices = @transform_2, window_bounds = array<i64: 1, 2, 32>}]} {
    %c0_i32 = arith.constant 0 : i32
    %0 = arith.cmpi eq, %arg1, %c0_i32 : i32
    %1 = arith.extui %0 : i1 to i32
    %c0_i32_0 = arith.constant 0 : i32
    %2 = arith.cmpi ne, %1, %c0_i32_0 : i32
    scf.if %2 {
      %cst_17 = arith.constant 0xFF800000 : f32
      %40 = vector.broadcast %cst_17 : f32 to vector<8x32xf32>
      %c0_18 = arith.constant 0 : index
      %c0_19 = arith.constant 0 : index
      %41 = vector.load %arg5[%c0_18, %c0_19] : memref<8x32xf32, #tpu.memory_space<vmem>>, vector<8x32xf32>
      tpu.vector_store %arg5[%c0_18, %c0_19], %40 {strides = array<i32>} : memref<8x32xf32, #tpu.memory_space<vmem>>, vector<8x32xf32>,
    } else {
    }
    %c0 = arith.constant 0 : index
    %c0_1 = arith.constant 0 : index
    %3 = vector.load %arg2[%c0, %c0_1] : memref<48x32xf32, #tpu.memory_space<vmem>>, vector<48x32xf32>
    %c1_i32 = arith.constant 1 : i32
    %4 = arith.muli %arg0, %c1_i32 : i32
    %5 = arith.addi %4, %arg1 : i32
    %c48_i32 = arith.constant 48 : i32
    %6 = arith.muli %5, %c48_i32 : i32
    %7 = tpu.iota {dimensions = array<i32: 0>} : vector<48x1xi32>
    %8 = vector.broadcast %6 : i32 to vector<48x1xi32>
    %9 = arith.addi %8, %7 : vector<48x1xi32>
    %c48_i32_2 = arith.constant 48 : i32
    %10 = vector.broadcast %c48_i32_2 : i32 to vector<48x1xi32>
    %11 = arith.cmpi slt, %9, %10 : vector<48x1xi32>
    %c0_3 = arith.constant 0 : index
    %c0_4 = arith.constant 0 : index
    %12 = vector.load %arg3[%c0_3, %c0_4] : memref<48x1xi32, #tpu.memory_space<vmem>>, vector<48x1xi32>
    %c-1_i32 = arith.constant -1 : i32
    %13 = vector.broadcast %c-1_i32 : i32 to vector<48x1xi32>
    %14 = arith.select %11, %12, %13 : vector<48x1xi1>, vector<48x1xi32>
    %c0_i32_5 = arith.constant 0 : i32
    %15 = vector.broadcast %c0_i32_5 : i32 to vector<48x1xi32>
    %16 = arith.cmpi eq, %14, %15 : vector<48x1xi32>
    %cst = arith.constant 0xFF800000 : f32
    %17 = vector.shape_cast %16 : vector<48x1xi1> to vector<48x1xi1>
    %18 = vector.broadcast %17 : vector<48x1xi1> to vector<48x32xi1>
    %19 = vector.broadcast %cst : f32 to vector<48x32xf32>
    %20 = arith.select %18, %3, %19 : vector<48x32xi1>, vector<48x32xf32>
    %cst_6 = arith.constant dense<0xFF800000> : vector<32xf32>
    %21 = vector.multi_reduction <maximumf>, %20, %cst_6 [0] : vector<48x32xf32> to vector<32xf32>
    %22 = vector.shape_cast %21 : vector<32xf32> to vector<1x32xf32>
    %c1_i32_7 = arith.constant 1 : i32
    %23 = vector.broadcast %c1_i32_7 : i32 to vector<48x1xi32>
    %24 = arith.cmpi eq, %14, %23 : vector<48x1xi32>
    %cst_8 = arith.constant 0xFF800000 : f32
    %25 = vector.shape_cast %24 : vector<48x1xi1> to vector<48x1xi1>
    %26 = vector.broadcast %25 : vector<48x1xi1> to vector<48x32xi1>
    %27 = vector.broadcast %cst_8 : f32 to vector<48x32xf32>
    %28 = arith.select %26, %3, %27 : vector<48x32xi1>, vector<48x32xf32>
    %cst_9 = arith.constant dense<0xFF800000> : vector<32xf32>
    %29 = vector.multi_reduction <maximumf>, %28, %cst_9 [0] : vector<48x32xf32> to vector<32xf32>
    %30 = vector.shape_cast %29 : vector<32xf32> to vector<1x32xf32>
    %31 = tpu.concatenate %22, %30 in 0 : vector<1x32xf32>, vector<1x32xf32> -> vector<2x32xf32>
    %cst_10 = arith.constant 0xFF800000 : f32
    %32 = vector.broadcast %cst_10 : f32 to vector<6x32xf32>
    %33 = tpu.concatenate %31, %32 in 0 : vector<2x32xf32>, vector<6x32xf32> -> vector<8x32xf32>
    %c0_11 = arith.constant 0 : index
    %c0_12 = arith.constant 0 : index
    %34 = vector.load %arg5[%c0_11, %c0_12] : memref<8x32xf32, #tpu.memory_space<vmem>>, vector<8x32xf32>
    %35 = arith.maximumf %34, %33 : vector<8x32xf32>
    %c0_13 = arith.constant 0 : index
    %c0_14 = arith.constant 0 : index
    %36 = vector.load %arg5[%c0_13, %c0_14] : memref<8x32xf32, #tpu.memory_space<vmem>>, vector<8x32xf32>
    tpu.vector_store %arg5[%c0_13, %c0_14], %35 {strides = array<i32>} : memref<8x32xf32, #tpu.memory_space<vmem>>, vector<8x32xf32>,
    %c0_i32_15 = arith.constant 0 : i32
    %37 = arith.cmpi eq, %arg1, %c0_i32_15 : i32
    %38 = arith.extui %37 : i1 to i32
    %c0_i32_16 = arith.constant 0 : i32
    %39 = arith.cmpi ne, %38, %c0_i32_16 : i32
    scf.if %39 {
      %c0_17 = arith.constant 0 : index
      %c0_18 = arith.constant 0 : index
      %40 = vector.load %arg5[%c0_17, %c0_18] : memref<8x32xf32, #tpu.memory_space<vmem>>, vector<2x32xf32>
      %c0_19 = arith.constant 0 : index
      %c0_20 = arith.constant 0 : index
      %c0_21 = arith.constant 0 : index
      %41 = vector.load %arg4[%c0_19, %c0_20, %c0_21] : memref<1x2x32xf32, #tpu.memory_space<vmem>>, vector<1x2x32xf32>
      %42 = vector.shape_cast %41 : vector<1x2x32xf32> to vector<2x32xf32>
      %43 = vector.shape_cast %40 : vector<2x32xf32> to vector<1x2x32xf32>
      tpu.vector_store %arg4[%c0_19, %c0_20, %c0_21], %43 {strides = array<i32>} : memref<1x2x32xf32, #tpu.memory_space<vmem>>, vector<1x2x32xf32>,
    } else {
    }
    return
  }
  func.func @transform_0(%arg0: i32, %arg1: i32) -> (i32, i32) {
    %c1_i32 = arith.constant 1 : i32
    %0 = arith.muli %arg0, %c1_i32 : i32
    %1 = arith.addi %0, %arg1 : i32
    %c0_i32 = arith.constant 0 : i32
    %2 = arith.minsi %1, %c0_i32 : i32
    %c0_i32_0 = arith.constant 0 : i32
    %c0_i32_1 = arith.constant 0 : i32
    return %2, %c0_i32_0 : i32, i32
  }
  func.func @transform_1(%arg0: i32, %arg1: i32) -> (i32, i32) {
    %c1_i32 = arith.constant 1 : i32
    %0 = arith.muli %arg0, %c1_i32 : i32
    %1 = arith.addi %0, %arg1 : i32
    %c0_i32 = arith.constant 0 : i32
    %2 = arith.minsi %1, %c0_i32 : i32
    %c0_i32_0 = arith.constant 0 : i32
    %c0_i32_1 = arith.constant 0 : i32
    return %2, %c0_i32_0 : i32, i32
  }
  func.func @transform_2(%arg0: i32, %arg1: i32) -> (i32, i32, i32) {
    %c0_i32 = arith.constant 0 : i32
    %c0_i32_0 = arith.constant 0 : i32
    %c0_i32_1 = arith.constant 0 : i32
    return %arg0, %c0_i32, %c0_i32_0 : i32, i32, i32
  }
}

</mosaic_0001>

<llo_original>
// kernel: tpu_custom_call.1
$region0: #{tpu_custom_call.1}
  #allocation0 [shape = 'u32[]', space=smem, size = 0x4, offset = 0x4, fixed_abs, tag = 'smem constant byte address 0x4 - core index']
  #allocation1 [shape = 'u32[144,128]{1,0:T(1,128)}', space=vmem, size = 0x12000, scoped, tag = 'internal scratch']
  #allocation2 [shape = 'f32[8,32]{1,0:T(8,128)}', space=vmem, size = 0x1000, scoped, tag = 'scratch operand']
  %s0 = inlined_call_operand.vmem [shape: f32[48,32], index: 0, kind: input, shape index: {}]
  %s1 = inlined_call_operand.vmem [shape: s32[48,1], index: 1, kind: input, shape index: {}]
  %s2 = inlined_call_operand.hbm [shape: f32[1,2,32], index: 2, kind: output, shape index: {}]
  %s3 = sld [smem:[#allocation0]]
  $region26: #{tpu_custom_call.1} parent=0
    _
  %s5 = ssub.s32 1, %s3
  %s6 = scalar_select 0, %s5, %s3
  $region1: #{tpu_custom_call.1} parent=0
    #allocation3 [shape = 'u8[1024]{0}', space=vmem, size = 0x400, scoped, tag = 'output window, operand 0, single buffered']
    #allocation4 [shape = 's32[1]{0}', space=sflag, size = 0x4, scoped, tag = 'scoped memory for tpu_custom_call.1']
    %7 = vsyncpa [#allocation4], 0
    // Predicated region
    $region2: #{tpu_custom_call.1} parent=1 // pred_check
      _
    $region3: #{tpu_custom_call.1} parent=1 // pred_check_branch
      %9 = sbr.rel (0) target = $region5
    $region4: #{tpu_custom_call.1} parent=1 // pred_region
      %s10 = sadd.s32 0, 0
      %p11 = scmp.lt.s32.totalorder %s10, 0
      %s12 = scalar_select %p11, %s10, 0
      %s13 = smul.u32 6, %s12
      %p14 = scmp.lt.s32.totalorder %s13, 5
      %s15 = scalar_select %p14, %s13, 5
      %s16 = smul.addr %s15, 8
      %s17 = scalar_lea.vmem %s0, %s16
      %s18 = sadd.s32 0, 0
      %p19 = scmp.lt.s32.totalorder %s18, 0
      %s20 = scalar_select %p19, %s18, 0
      %s21 = smul.u32 6, %s20
    $region5: #{tpu_custom_call.1} parent=1 // pred_fallthru
      _
    // Predicated region
    $region6: #{tpu_custom_call.1} parent=1 // pred_check
      _
    $region7: #{tpu_custom_call.1} parent=1 // pred_check_branch
      %23 = sbr.rel (0) target = $region9
    $region8: #{tpu_custom_call.1} parent=1 // pred_region
      %s24 = sadd.s32 0, 0
      %p25 = scmp.lt.s32.totalorder %s24, 0
      %s26 = scalar_select %p25, %s24, 0
      %s27 = smul.u32 6, %s26
      %p28 = scmp.lt.s32.totalorder %s27, 5
      %s29 = scalar_select %p28, %s27, 5
      %s30 = smul.addr %s29, 8
      %s31 = scalar_lea.vmem %s1, %s30
      %s32 = sadd.s32 0, 0
      %p33 = scmp.lt.s32.totalorder %s32, 0
      %s34 = scalar_select %p33, %s32, 0
      %s35 = smul.u32 6, %s34
    $region9: #{tpu_custom_call.1} parent=1 // pred_fallthru
      _
    %s36 = sadd.s32 0, 0
    %p37 = scmp.lt.s32.totalorder %s36, 0
    %s38 = scalar_select %p37, %s36, 0
    %s39 = smul.u32 6, %s38
    %p40 = scmp.lt.s32.totalorder %s39, 5
    %s41 = scalar_select %p40, %s39, 5
    %s42 = smul.addr %s41, 8
    %s43 = scalar_lea.vmem %s0, %s42
    %s44 = sadd.s32 0, 0
    %p45 = scmp.lt.s32.totalorder %s44, 0
    %s46 = scalar_select %p45, %s44, 0
    %s47 = smul.u32 6, %s46
    %p48 = scmp.lt.s32.totalorder %s47, 5
    %s49 = scalar_select %p48, %s47, 5
    %s50 = smul.addr %s49, 8
    %s51 = scalar_lea.vmem %s1, %s50
    %s52 = sadd.s32 0, 0
    %p53 = scmp.lt.s32.totalorder %s52, 0
    %s54 = scalar_select %p53, %s52, 0
    %s55 = smul.u32 6, %s54
    %p56 = scmp.lt.s32.totalorder %s55, 5
    %s57 = scalar_select %p56, %s55, 5
    %s58 = smul.addr %s57, 8
    %s59 = scalar_lea.vmem %s0, %s58
    %s60 = sadd.s32 0, 0
    %p61 = scmp.lt.s32.totalorder %s60, 0
    %s62 = scalar_select %p61, %s60, 0
    %s63 = smul.u32 6, %s62
    %s64 = sadd.s32 0, 0
    %p65 = scmp.lt.s32.totalorder %s64, 0
    %s66 = scalar_select %p65, %s64, 0
    %s67 = smul.u32 6, %s66
    %p68 = scmp.lt.s32.totalorder %s67, 5
    %s69 = scalar_select %p68, %s67, 5
    %s70 = smul.addr %s69, 8
    %s71 = scalar_lea.vmem %s1, %s70
    %s72 = sadd.s32 0, 0
    %p73 = scmp.lt.s32.totalorder %s72, 0
    %s74 = scalar_select %p73, %s72, 0
    %s75 = smul.u32 6, %s74
    %p76 = scmp.eq.s32.totalorder 0, 0
    // Predicated region
    $region10: #{tpu_custom_call.1} parent=1 // pred_check
      %p77 = pneg %p76
    $region11: #{tpu_custom_call.1} parent=1 // pred_check_branch
      %79 = sbr.rel (%p77) target = $region13
    $region12: #{tpu_custom_call.1} parent=1 // pred_region
      %vm80 = vcmask 261120
      %81 = vst.msk [vmem:[#allocation2] sm:$0xff] %vm80, -inf
    $region13: #{tpu_custom_call.1} parent=1 // pred_fallthru
      _
    %v82 = vld [vmem:[%s59] sm:$0xff]
    %v83 = vld [vmem:[%s59 + $0x8] sm:$0xff]
    %v84 = vld [vmem:[%s59 + $0x10] sm:$0xff]
    %v85 = vld [vmem:[%s59 + $0x18] sm:$0xff]
    %v86 = vld [vmem:[%s59 + $0x20] sm:$0xff]
    %v87 = vld [vmem:[%s59 + $0x28] sm:$0xff]
    %s88 = sadd.s32 0, 0
    %s89 = smul.u32 %s88, 48
    %v90 = vlaneseq
    %v91 = vshrl.u32 %v90, 7
    %v92 = vadd.s32 %v91, 8
    %v93 = vadd.s32 %v91, 16
    %v94 = vadd.s32 %v91, 24
    %v95 = vadd.s32 %v91, 32
    %v96 = vadd.s32 %v91, 40
    %v97 = vstv %s89
    %v98 = vadd.s32 %v97, %v91
    %v99 = vadd.s32 %v97, %v92
    %v100 = vadd.s32 %v97, %v93
    %v101 = vadd.s32 %v97, %v94
    %v102 = vadd.s32 %v97, %v95
    %v103 = vadd.s32 %v97, %v96
    %vm104 = vcmp.lt.s32.totalorder %v98, 48
    %vm105 = vcmp.lt.s32.totalorder %v99, 48
    %vm106 = vcmp.lt.s32.totalorder %v100, 48
    %vm107 = vcmp.lt.s32.totalorder %v101, 48
    %vm108 = vcmp.lt.s32.totalorder %v102, 48
    %vm109 = vcmp.lt.s32.totalorder %v103, 48
    %v110 = vld [vmem:[%s71] sm:$0xff]
    %v111 = vld [vmem:[%s71 + $0x8] sm:$0xff]
    %v112 = vld [vmem:[%s71 + $0x10] sm:$0xff]
    %v113 = vld [vmem:[%s71 + $0x18] sm:$0xff]
    %v114 = vld [vmem:[%s71 + $0x20] sm:$0xff]
    %v115 = vld [vmem:[%s71 + $0x28] sm:$0xff]
    %v116 = vsel %vm104, %v110, 4294967295
    %v117 = vsel %vm105, %v111, 4294967295
    %v118 = vsel %vm106, %v112, 4294967295
    %v119 = vsel %vm107, %v113, 4294967295
    %v120 = vsel %vm108, %v114, 4294967295
    %v121 = vsel %vm109, %v115, 4294967295
    %vm122 = vcmp.eq.s32.totalorder %v116, 0
    %vm123 = vcmp.eq.s32.totalorder %v117, 0
    %vm124 = vcmp.eq.s32.totalorder %v118, 0
    %vm125 = vcmp.eq.s32.totalorder %v119, 0
    %vm126 = vcmp.eq.s32.totalorder %v120, 0
    %vm127 = vcmp.eq.s32.totalorder %v121, 0
    %v128 = vsel %vm122, 1, 0
    %v129 = vsel %vm123, 1, 0
    %v130 = vsel %vm124, 1, 0
    %v131 = vsel %vm125, 1, 0
    %v132 = vsel %vm126, 1, 0
    %v133 = vsel %vm127, 1, 0
    %134 = vset.pattern.permute.xlu0 0
    %135 = vperm.xlu0 %134, %v128
    %v136 = vpop.permute.xlu0 %135
    %137 = vset.pattern.permute.xlu0 0
    %138 = vperm.xlu0 %137, %v129
    %v139 = vpop.permute.xlu0 %138
    %140 = vset.pattern.permute.xlu0 0
    %141 = vperm.xlu0 %140, %v130
    %v142 = vpop.permute.xlu0 %141
    %143 = vset.pattern.permute.xlu0 0
    %144 = vperm.xlu0 %143, %v131
    %v145 = vpop.permute.xlu0 %144
    %146 = vset.pattern.permute.xlu0 0
    %147 = vperm.xlu0 %146, %v132
    %v148 = vpop.permute.xlu0 %147
    %149 = vset.pattern.permute.xlu0 0
    %150 = vperm.xlu0 %149, %v133
    %v151 = vpop.permute.xlu0 %150
    %vm152 = vcmp.eq.s32.totalorder %v136, 1
    %vm153 = vcmp.eq.s32.totalorder %v139, 1
    %vm154 = vcmp.eq.s32.totalorder %v142, 1
    %vm155 = vcmp.eq.s32.totalorder %v145, 1
    %vm156 = vcmp.eq.s32.totalorder %v148, 1
    %vm157 = vcmp.eq.s32.totalorder %v151, 1
    %v158 = vsel %vm152, %v82, -inf
    %v159 = vsel %vm153, %v83, -inf
    %v160 = vsel %vm154, %v84, -inf
    %v161 = vsel %vm155, %v85, -inf
    %v162 = vsel %vm156, %v86, -inf
    %v163 = vsel %vm157, %v87, -inf
    %vm164 = vcmask 261120
    %v165 = vsel %vm164, %v158, -inf
    %v166 = vsel %vm164, %v159, -inf
    %v167 = vsel %vm164, %v160, -inf
    %v168 = vsel %vm164, %v161, -inf
    %v169 = vsel %vm164, %v162, -inf
    %v170 = vmax.f32 %v165, %v169
    %v171 = vsel %vm164, %v163, -inf
    %v172 = vmax.f32 %v166, %v171
    %v173 = vmax.f32 %v170, %v172
    %v174 = vmax.f32 %v167, %v168
    %v175 = vmax.f32 %v173, %v174
    %v176 = vrot.slane %v175, 4
    %v177 = vmax.f32 %v175, %v176
    %v178 = vrot.slane %v177, 2
    %v179 = vmax.f32 %v177, %v178
    %v180 = vrot.slane %v179, 1
    %v181 = vmax.f32 %v179, %v180
    %vm182 = vcmp.eq.s32.totalorder %v116, 1
    %vm183 = vcmp.eq.s32.totalorder %v117, 1
    %vm184 = vcmp.eq.s32.totalorder %v118, 1
    %vm185 = vcmp.eq.s32.totalorder %v119, 1
    %vm186 = vcmp.eq.s32.totalorder %v120, 1
    %vm187 = vcmp.eq.s32.totalorder %v121, 1
    %v188 = vsel %vm182, 1, 0
    %v189 = vsel %vm183, 1, 0
    %v190 = vsel %vm184, 1, 0
    %v191 = vsel %vm185, 1, 0
    %v192 = vsel %vm186, 1, 0
    %v193 = vsel %vm187, 1, 0
    %194 = vset.pattern.permute.xlu0 0
    %195 = vperm.xlu0 %194, %v188
    %v196 = vpop.permute.xlu0 %195
    %197 = vset.pattern.permute.xlu0 0
    %198 = vperm.xlu0 %197, %v189
    %v199 = vpop.permute.xlu0 %198
    %200 = vset.pattern.permute.xlu0 0
    %201 = vperm.xlu0 %200, %v190
    %v202 = vpop.permute.xlu0 %201
    %203 = vset.pattern.permute.xlu0 0
    %204 = vperm.xlu0 %203, %v191
    %v205 = vpop.permute.xlu0 %204
    %206 = vset.pattern.permute.xlu0 0
    %207 = vperm.xlu0 %206, %v192
    %v208 = vpop.permute.xlu0 %207
    %209 = vset.pattern.permute.xlu0 0
    %210 = vperm.xlu0 %209, %v193
    %v211 = vpop.permute.xlu0 %210
    %vm212 = vcmp.eq.s32.totalorder %v196, 1
    %vm213 = vcmp.eq.s32.totalorder %v199, 1
    %vm214 = vcmp.eq.s32.totalorder %v202, 1
    %vm215 = vcmp.eq.s32.totalorder %v205, 1
    %vm216 = vcmp.eq.s32.totalorder %v208, 1
    %vm217 = vcmp.eq.s32.totalorder %v211, 1
    %v218 = vsel %vm212, %v82, -inf
    %v219 = vsel %vm213, %v83, -inf
    %v220 = vsel %vm214, %v84, -inf
    %v221 = vsel %vm215, %v85, -inf
    %v222 = vsel %vm216, %v86, -inf
    %v223 = vsel %vm217, %v87, -inf
    %v224 = vsel %vm164, %v218, -inf
    %v225 = vsel %vm164, %v219, -inf
    %v226 = vsel %vm164, %v220, -inf
    %v227 = vsel %vm164, %v221, -inf
    %v228 = vsel %vm164, %v222, -inf
    %v229 = vmax.f32 %v224, %v228
    %v230 = vsel %vm164, %v223, -inf
    %v231 = vmax.f32 %v225, %v230
    %v232 = vmax.f32 %v229, %v231
    %v233 = vmax.f32 %v226, %v227
    %v234 = vmax.f32 %v232, %v233
    %v235 = vrot.slane %v234, 4
    %v236 = vmax.f32 %v234, %v235
    %v237 = vrot.slane %v236, 2
    %v238 = vmax.f32 %v236, %v237
    %v239 = vrot.slane %v238, 1
    %v240 = vmax.f32 %v238, %v239
    %vm241 = vcmask 1040384
    %v242 = vsel %vm241, %v181, %v240
    %vm243 = vcmask 1041408
    %v244 = vsel %vm243, %v242, -inf
    %v245 = vld [vmem:[#allocation2] sm:$0xff]
    %v246 = vmax.f32 %v245, %v244
    %247 = vst.msk [vmem:[#allocation2] sm:$0xff] %vm164, %v246
    // Predicated region
    $region14: #{tpu_custom_call.1} parent=1 // pred_check
      %p248 = pneg %p76
    $region15: #{tpu_custom_call.1} parent=1 // pred_check_branch
      %250 = sbr.rel (%p248) target = $region17
    $region16: #{tpu_custom_call.1} parent=1 // pred_region
      %v251 = vld [vmem:[#allocation2] sm:$0x3]
      %vm252 = vcmask 254976
      %253 = vst.msk [vmem:[#allocation3] sm:$0x3] %vm252, %v251
    $region17: #{tpu_custom_call.1} parent=1 // pred_fallthru
      _
    // Predicated region
    $region18: #{tpu_custom_call.1} parent=1 // pred_check
      _
    $region19: #{tpu_custom_call.1} parent=1 // pred_check_branch
      %255 = sbr.rel (0) target = $region21
    $region20: #{tpu_custom_call.1} parent=1 // pred_region
      %s257 = ssub.s32 32, 32
      %258 = vsyncadd [#allocation4], %s257
      %s260 = sshll.u32 [#allocation3], 4
      %s261 = int_to_ptr.vmem [resolvable:$true] %s260
      %263 = dma.vmem_to_hbm [thread:$0]  %s261, 32, %s2, [#allocation4]
    $region21: #{tpu_custom_call.1} parent=1 // pred_fallthru
      _
    // Predicated region
    $region22: #{tpu_custom_call.1} parent=1 // pred_check
      _
    $region23: #{tpu_custom_call.1} parent=1 // pred_check_branch
      %265 = sbr.rel (0) target = $region25
    $region24: #{tpu_custom_call.1} parent=1 // pred_region
      %266 = dma.done [#allocation4], 32
    $region25: #{tpu_custom_call.1} parent=1 // pred_fallthru
      _
    %267 = vsyncpa [#allocation4], 1

</llo_original>
